<compile_context>
chip_gen: v6e
topology: v6e:2x2x1
jax: 0.10.0
libtpu: 0.0.40
codegen_flags: <defaults>
</compile_context>

<pallas_src>
import math

import jax
import jax.numpy as jnp
from jax import lax
from jax.experimental import pallas as pl
from jax.experimental.pallas import tpu as pltpu


# ---------------------------------------------------------------------------
# Kernels
# ---------------------------------------------------------------------------

def _noisy_linear_kernel(x_ref, muw_ref, sgw_ref, epsw_ref,
                         mub_ref, sgb_ref, epsb_ref, o_ref, acc_ref):
    """grid = (N_tiles, K_tiles); axis 1 (K) is the reduction ('arbitrary') axis."""
    k = pl.program_id(1)

    @pl.when(k == 0)
    def _init():
        acc_ref[...] = jnp.zeros_like(acc_ref)

    # Noisy weight tile in PyTorch layout (tn, tk): W = mu + sigma * eps (VPU work,
    # hidden under the MXU).
    w = muw_ref[...] + sgw_ref[...] * epsw_ref[...]

    # (B, tk) . (tn, tk) -> (B, tn): contract last dims of both (no transposes).
    acc_ref[...] += lax.dot_general(
        x_ref[...], w,
        dimension_numbers=(((1,), (1,)), ((), ())),
        preferred_element_type=jnp.float32)

    @pl.when(k == pl.num_programs(1) - 1)
    def _finalize():
        b = mub_ref[...] + sgb_ref[...] * epsb_ref[...]     # (1, tn), added once
        o_ref[...] = (acc_ref[...] + b).astype(o_ref.dtype)


def _plain_linear_kernel(x_ref, muw_ref, mub_ref, o_ref, acc_ref):
    """Eval path: y = x @ mu_w.T + mu_b; streams only mu_w / mu_b."""
    k = pl.program_id(1)

    @pl.when(k == 0)
    def _init():
        acc_ref[...] = jnp.zeros_like(acc_ref)

    acc_ref[...] += lax.dot_general(
        x_ref[...], muw_ref[...],
        dimension_numbers=(((1,), (1,)), ((), ())),
        preferred_element_type=jnp.float32)

    @pl.when(k == pl.num_programs(1) - 1)
    def _finalize():
        o_ref[...] = (acc_ref[...] + mub_ref[...]).astype(o_ref.dtype)


# ---------------------------------------------------------------------------
# Wrapper
# ---------------------------------------------------------------------------

def _round_up(x, m):
    return ((x + m - 1) // m) * m


def _pick_tile(dim, pref):
    """Full-extent block for small dims (satisfies the (8,128) rule trivially);
    otherwise `pref`-sized tiles over a zero-padded dimension."""
    if dim <= pref:
        return dim, dim
    return pref, _round_up(dim, pref)


def noisy_linear_forward(x, mu_w, sigma_w, eps_w, mu_b, sigma_b, eps_b,
                         is_training=True, *, tile_n=512, tile_k=512):
    """x: (B, num_in); mu_w/sigma_w/eps_w: (num_out, num_in); *_b: (num_out,)."""
    B, num_in = x.shape
    num_out = mu_w.shape[0]

    tk, k_pad = _pick_tile(num_in, tile_k)
    tn, n_pad = _pick_tile(num_out, tile_n)

    # Zero-pad to tile multiples (no-op for already-aligned shapes).  For real
    # deployments, store the parameters pre-padded so this costs nothing per call.
    def pad_w(a):
        return jnp.pad(a, ((0, n_pad - num_out), (0, k_pad - num_in)))

    def pad_b(a):
        return jnp.pad(a, (0, n_pad - num_out)).reshape(1, n_pad)

    x_p = jnp.pad(x, ((0, 0), (0, k_pad - num_in)))

    grid = (n_pad // tn, k_pad // tk)
    x_spec = pl.BlockSpec((B, tk), lambda j, k: (0, k))
    w_spec = pl.BlockSpec((tn, tk), lambda j, k: (j, k))
    b_spec = pl.BlockSpec((1, tn), lambda j, k: (0, j))
    o_spec = pl.BlockSpec((B, tn), lambda j, k: (0, j))

    compiler_params = pltpu.CompilerParams(
        dimension_semantics=("parallel", "arbitrary"),
        vmem_limit_bytes=32 << 20)

    if is_training:
        out = pl.pallas_call(
            _noisy_linear_kernel,
            out_shape=jax.ShapeDtypeStruct((B, n_pad), x.dtype),
            grid_spec=pltpu.PrefetchScalarGridSpec(
                num_scalar_prefetch=0,
                grid=grid,
                in_specs=[x_spec, w_spec, w_spec, w_spec,
                          b_spec, b_spec, b_spec],
                out_specs=o_spec,
                scratch_shapes=[pltpu.VMEM((B, tn), jnp.float32)]),
            compiler_params=compiler_params,
        )(x_p, pad_w(mu_w), pad_w(sigma_w), pad_w(eps_w),
          pad_b(mu_b), pad_b(sigma_b), pad_b(eps_b))
    else:
        out = pl.pallas_call(
            _plain_linear_kernel,
            out_shape=jax.ShapeDtypeStruct((B, n_pad), x.dtype),
            grid_spec=pltpu.PrefetchScalarGridSpec(
                num_scalar_prefetch=0,
                grid=grid,
                in_specs=[x_spec, w_spec, b_spec],
                out_specs=o_spec,
                scratch_shapes=[pltpu.VMEM((B, tn), jnp.float32)]),
            compiler_params=compiler_params,
        )(x_p, pad_w(mu_w), pad_b(mu_b))

    return out[:, :num_out]


def init_noisy_linear_params(key, num_in, num_out):
    """Deterministic init mirroring reset_parameters()."""
    std = math.sqrt(3.0 / num_in)
    k1, k2 = jax.random.split(key)
    mu_w = jax.random.uniform(k1, (num_out, num_in), jnp.float32, -std, std)
    mu_b = jax.random.uniform(k2, (num_out,), jnp.float32, -std, std)
    sigma_w = jnp.full((num_out, num_in), 0.017, jnp.float32)
    sigma_b = jnp.full((num_out,), 0.017, jnp.float32)
    return mu_w, mu_b, sigma_w, sigma_b


def _reference(x, mu_w, sigma_w, eps_w, mu_b, sigma_b, eps_b, is_training):
    if is_training:
        w = mu_w + sigma_w * eps_w
        b = mu_b + sigma_b * eps_b
    else:
        w = mu_w
        b = mu_b
    return jnp.dot(x, w.T, precision=lax.Precision.HIGHEST) + b


def _run_case(key, batch, num_in, num_out, is_training, tile_n, tile_k,
              atol, rtol):
    k_param, k_x, k_ew, k_eb = jax.random.split(key, 4)
    mu_w, mu_b, sigma_w, sigma_b = init_noisy_linear_params(k_param, num_in, num_out)
    x = jax.random.normal(k_x, (batch, num_in), jnp.float32)
    # reset_noise(): standard-normal noise, resampled per forward call.
    eps_w = jax.random.normal(k_ew, (num_out, num_in), jnp.float32)
    eps_b = jax.random.normal(k_eb, (num_out,), jnp.float32)

    y = noisy_linear_forward(x, mu_w, sigma_w, eps_w, mu_b, sigma_b, eps_b,
                             is_training=is_training,
                             tile_n=tile_n, tile_k=tile_k)
    y = jax.block_until_ready(y)

    y_ref = _reference(x, mu_w, sigma_w, eps_w, mu_b, sigma_b, eps_b, is_training)
    assert y.shape == (batch, num_out)
    assert jnp.allclose(y, y_ref, atol=atol, rtol=rtol), (
        f"mismatch: max abs err = {jnp.max(jnp.abs(y - y_ref))}")


if __name__ == "__main__":
    key = jax.random.PRNGKey(0)
    k1, k2, k3 = jax.random.split(key, 3)

    # 1) Small shapes (single-tile path), training.
    _run_case(k1, batch=8, num_in=32, num_out=16, is_training=True,
              tile_n=512, tile_k=512, atol=1e-5, rtol=1e-5)

    # 2) Shapes exercising the tiled grid + padding + K-accumulator, training.
    _run_case(k2, batch=4, num_in=384, num_out=320, is_training=True,
              tile_n=256, tile_k=256, atol=1e-4, rtol=1e-5)

    # 3) Eval path (mu-only plain linear kernel).
    _run_case(k3, batch=8, num_in=32, num_out=16, is_training=False,
              tile_n=512, tile_k=512, atol=1e-5, rtol=1e-5)

    print("KERNEL_OK")
</pallas_src>

<mosaic_0001>
module attributes {stable_mosaic.version = 11 : i64} {
  func.func @_noisy_linear_kernel(%arg0: i32, %arg1: i32, %arg2: memref<8x32xf32, #tpu.memory_space<vmem>>, %arg3: memref<16x32xf32, #tpu.memory_space<vmem>>, %arg4: memref<16x32xf32, #tpu.memory_space<vmem>>, %arg5: memref<16x32xf32, #tpu.memory_space<vmem>>, %arg6: memref<1x16xf32, #tpu.memory_space<vmem>>, %arg7: memref<1x16xf32, #tpu.memory_space<vmem>>, %arg8: memref<1x16xf32, #tpu.memory_space<vmem>>, %arg9: memref<8x16xf32, #tpu.memory_space<vmem>>, %arg10: memref<8x16xf32, #tpu.memory_space<vmem>>) attributes {dimension_semantics = [#tpu.dimension_semantics<parallel>, #tpu.dimension_semantics<arbitrary>], iteration_bounds = array<i64: 1, 1>, scalar_prefetch = 0 : i64, scratch_operands = 1 : i64, tpu.core_type = #tpu.core_type<tc>, window_params = [{transform_indices = @transform_0, window_bounds = array<i64: 8, 32>}, {transform_indices = @transform_1, window_bounds = array<i64: 16, 32>}, {transform_indices = @transform_2, window_bounds = array<i64: 16, 32>}, {transform_indices = @transform_3, window_bounds = array<i64: 16, 32>}, {transform_indices = @transform_4, window_bounds = array<i64: 1, 16>}, {transform_indices = @transform_5, window_bounds = array<i64: 1, 16>}, {transform_indices = @transform_6, window_bounds = array<i64: 1, 16>}, {transform_indices = @transform_7, window_bounds = array<i64: 8, 16>}]} {
    %c0_i32 = arith.constant 0 : i32
    %0 = arith.cmpi eq, %arg1, %c0_i32 : i32
    %1 = arith.extui %0 : i1 to i32
    %c0_i32_0 = arith.constant 0 : i32
    %2 = arith.cmpi ne, %1, %c0_i32_0 : i32
    scf.if %2 {
      %cst_14 = arith.constant 0.000000e+00 : f32
      %16 = vector.broadcast %cst_14 : f32 to vector<8x16xf32>
      %c0_15 = arith.constant 0 : index
      %c0_16 = arith.constant 0 : index
      %17 = vector.load %arg10[%c0_15, %c0_16] : memref<8x16xf32, #tpu.memory_space<vmem>>, vector<8x16xf32>
      tpu.vector_store %arg10[%c0_15, %c0_16], %16 {strides = array<i32>} : memref<8x16xf32, #tpu.memory_space<vmem>>, vector<8x16xf32>,
    } else {
    }
    %c0 = arith.constant 0 : index
    %c0_1 = arith.constant 0 : index
    %3 = vector.load %arg3[%c0, %c0_1] : memref<16x32xf32, #tpu.memory_space<vmem>>, vector<16x32xf32>
    %c0_2 = arith.constant 0 : index
    %c0_3 = arith.constant 0 : index
    %4 = vector.load %arg4[%c0_2, %c0_3] : memref<16x32xf32, #tpu.memory_space<vmem>>, vector<16x32xf32>
    %c0_4 = arith.constant 0 : index
    %c0_5 = arith.constant 0 : index
    %5 = vector.load %arg5[%c0_4, %c0_5] : memref<16x32xf32, #tpu.memory_space<vmem>>, vector<16x32xf32>
    %6 = arith.mulf %4, %5 : vector<16x32xf32>
    %7 = arith.addf %3, %6 : vector<16x32xf32>
    %c0_6 = arith.constant 0 : index
    %c0_7 = arith.constant 0 : index
    %8 = vector.load %arg10[%c0_6, %c0_7] : memref<8x16xf32, #tpu.memory_space<vmem>>, vector<8x16xf32>
    %c0_8 = arith.constant 0 : index
    %c0_9 = arith.constant 0 : index
    %9 = vector.load %arg2[%c0_8, %c0_9] : memref<8x32xf32, #tpu.memory_space<vmem>>, vector<8x32xf32>
    %cst = arith.constant dense<0.000000e+00> : vector<8x16xf32>
    %10 = tpu.matmul %9, %7, %cst {dimension_numbers = #tpu.dot_dimension_numbers<[1], [1], [0], [0], [0, 0, 1, 0], [], []>} : vector<8x32xf32>, vector<16x32xf32>, vector<8x16xf32> -> vector<8x16xf32>
    %11 = arith.addf %8, %10 : vector<8x16xf32>
    %c0_10 = arith.constant 0 : index
    %c0_11 = arith.constant 0 : index
    %12 = vector.load %arg10[%c0_10, %c0_11] : memref<8x16xf32, #tpu.memory_space<vmem>>, vector<8x16xf32>
    tpu.vector_store %arg10[%c0_10, %c0_11], %11 {strides = array<i32>} : memref<8x16xf32, #tpu.memory_space<vmem>>, vector<8x16xf32>,
    %c0_i32_12 = arith.constant 0 : i32
    %13 = arith.cmpi eq, %arg1, %c0_i32_12 : i32
    %14 = arith.extui %13 : i1 to i32
    %c0_i32_13 = arith.constant 0 : i32
    %15 = arith.cmpi ne, %14, %c0_i32_13 : i32
    scf.if %15 {
      %c0_14 = arith.constant 0 : index
      %c0_15 = arith.constant 0 : index
      %16 = vector.load %arg6[%c0_14, %c0_15] : memref<1x16xf32, #tpu.memory_space<vmem>>, vector<1x16xf32>
      %c0_16 = arith.constant 0 : index
      %c0_17 = arith.constant 0 : index
      %17 = vector.load %arg7[%c0_16, %c0_17] : memref<1x16xf32, #tpu.memory_space<vmem>>, vector<1x16xf32>
      %c0_18 = arith.constant 0 : index
      %c0_19 = arith.constant 0 : index
      %18 = vector.load %arg8[%c0_18, %c0_19] : memref<1x16xf32, #tpu.memory_space<vmem>>, vector<1x16xf32>
      %19 = arith.mulf %17, %18 : vector<1x16xf32>
      %20 = arith.addf %16, %19 : vector<1x16xf32>
      %c0_20 = arith.constant 0 : index
      %c0_21 = arith.constant 0 : index
      %21 = vector.load %arg10[%c0_20, %c0_21] : memref<8x16xf32, #tpu.memory_space<vmem>>, vector<8x16xf32>
      %22 = vector.broadcast %20 : vector<1x16xf32> to vector<8x16xf32>
      %23 = arith.addf %21, %22 : vector<8x16xf32>
      %c0_22 = arith.constant 0 : index
      %c0_23 = arith.constant 0 : index
      %24 = vector.load %arg9[%c0_22, %c0_23] : memref<8x16xf32, #tpu.memory_space<vmem>>, vector<8x16xf32>
      tpu.vector_store %arg9[%c0_22, %c0_23], %23 {strides = array<i32>} : memref<8x16xf32, #tpu.memory_space<vmem>>, vector<8x16xf32>,
    } else {
    }
    return
  }
  func.func @transform_0(%arg0: i32, %arg1: i32) -> (i32, i32) {
    %c0_i32 = arith.constant 0 : i32
    %c0_i32_0 = arith.constant 0 : i32
    return %c0_i32, %arg1 : i32, i32
  }
  func.func @transform_1(%arg0: i32, %arg1: i32) -> (i32, i32) {
    %c0_i32 = arith.constant 0 : i32
    return %arg0, %arg1 : i32, i32
  }
  func.func @transform_2(%arg0: i32, %arg1: i32) -> (i32, i32) {
    %c0_i32 = arith.constant 0 : i32
    return %arg0, %arg1 : i32, i32
  }
  func.func @transform_3(%arg0: i32, %arg1: i32) -> (i32, i32) {
    %c0_i32 = arith.constant 0 : i32
    return %arg0, %arg1 : i32, i32
  }
  func.func @transform_4(%arg0: i32, %arg1: i32) -> (i32, i32) {
    %c0_i32 = arith.constant 0 : i32
    %c0_i32_0 = arith.constant 0 : i32
    return %c0_i32, %arg0 : i32, i32
  }
  func.func @transform_5(%arg0: i32, %arg1: i32) -> (i32, i32) {
    %c0_i32 = arith.constant 0 : i32
    %c0_i32_0 = arith.constant 0 : i32
    return %c0_i32, %arg0 : i32, i32
  }
  func.func @transform_6(%arg0: i32, %arg1: i32) -> (i32, i32) {
    %c0_i32 = arith.constant 0 : i32
    %c0_i32_0 = arith.constant 0 : i32
    return %c0_i32, %arg0 : i32, i32
  }
  func.func @transform_7(%arg0: i32, %arg1: i32) -> (i32, i32) {
    %c0_i32 = arith.constant 0 : i32
    %c0_i32_0 = arith.constant 0 : i32
    return %c0_i32, %arg0 : i32, i32
  }
}

</mosaic_0001>

<llo_original>
// kernel: tpu_custom_call.1
$region0: #{tpu_custom_call.1}
  #allocation0 [shape = 'u32[]', space=smem, size = 0x4, offset = 0x4, fixed_abs, tag = 'smem constant byte address 0x4 - core index']
  #allocation1 [shape = 'u32[144,128]{1,0:T(1,128)}', space=vmem, size = 0x12000, scoped, tag = 'internal scratch']
  #allocation2 [shape = 'f32[8,16]{1,0:T(8,128)}', space=vmem, size = 0x1000, scoped, tag = 'scratch operand']
  %s0 = inlined_call_operand.hbm [shape: f32[8,32], index: 0, kind: input, shape index: {}]
  %s1 = inlined_call_operand.hbm [shape: f32[16,32], index: 1, kind: input, shape index: {}]
  %s2 = inlined_call_operand.hbm [shape: f32[16,32], index: 2, kind: input, shape index: {}]
  %s3 = inlined_call_operand.hbm [shape: f32[16,32], index: 3, kind: input, shape index: {}]
  %s4 = inlined_call_operand.vmem [shape: f32[1,16], index: 4, kind: input, shape index: {}]
  %s5 = inlined_call_operand.vmem [shape: f32[1,16], index: 5, kind: input, shape index: {}]
  %s6 = inlined_call_operand.vmem [shape: f32[1,16], index: 6, kind: input, shape index: {}]
  %s7 = inlined_call_operand.hbm [shape: f32[8,16], index: 7, kind: output, shape index: {}]
  %s8 = sld [smem:[#allocation0]]
  $region62: #{tpu_custom_call.1} parent=0
    _
  %s10 = ssub.s32 1, %s8
  %s11 = scalar_select 0, %s10, %s8
  $region1: #{tpu_custom_call.1} parent=0
    #allocation3 [shape = 'u8[4096]{0}', space=vmem, size = 0x1000, scoped, tag = 'input window, operand 0, single buffered']
    #allocation4 [shape = 's32[1]{0}', space=sflag, size = 0x4, scoped, tag = 'scoped memory for tpu_custom_call.1']
    #allocation5 [shape = 's32[1]{0}', space=sflag, size = 0x4, scoped, tag = 'scoped memory for tpu_custom_call.1']
    #allocation6 [shape = 'u8[8192]{0}', space=vmem, size = 0x2000, scoped, tag = 'input window, operand 1, single buffered']
    #allocation7 [shape = 's32[1]{0}', space=sflag, size = 0x4, scoped, tag = 'scoped memory for tpu_custom_call.1']
    #allocation8 [shape = 'u8[8192]{0}', space=vmem, size = 0x2000, scoped, tag = 'input window, operand 2, single buffered']
    #allocation9 [shape = 'u8[8192]{0}', space=vmem, size = 0x2000, scoped, tag = 'input window, operand 3, single buffered']
    #allocation10 [shape = 's32[1]{0}', space=sflag, size = 0x4, scoped, tag = 'scoped memory for tpu_custom_call.1']
    #allocation11 [shape = 'u8[4096]{0}', space=vmem, size = 0x1000, scoped, tag = 'output window, operand 0, single buffered']
    %12 = vsyncpa [#allocation4], 0
    %13 = vsyncpa [#allocation7], 0
    %14 = vsyncpa [#allocation10], 0
    %15 = vsyncpa [#allocation5], 0
    // Predicated region
    $region2: #{tpu_custom_call.1} parent=1 // pred_check
      _
    $region3: #{tpu_custom_call.1} parent=1 // pred_check_branch
      %17 = sbr.rel (0) target = $region5
    $region4: #{tpu_custom_call.1} parent=1 // pred_region
      %s19 = ssub.s32 128, 128
      %20 = vsyncadd [#allocation4], %s19
      %s22 = sshll.u32 [#allocation3], 4
      %s23 = int_to_ptr.vmem [resolvable:$true] %s22
      %25 = dma.hbm_to_vmem [thread:$0]  %s0, 128, %s23, [#allocation4]
    $region5: #{tpu_custom_call.1} parent=1 // pred_fallthru
      _
    // Predicated region
    $region6: #{tpu_custom_call.1} parent=1 // pred_check
      _
    $region7: #{tpu_custom_call.1} parent=1 // pred_check_branch
      %27 = sbr.rel (0) target = $region9
    $region8: #{tpu_custom_call.1} parent=1 // pred_region
      %s29 = ssub.s32 256, 256
      %30 = vsyncadd [#allocation7], %s29
      %s31 = sshll.u32 [#allocation6], 4
      %s32 = int_to_ptr.vmem [resolvable:$true] %s31
      %37 = dma.hbm_to_vmem [thread:$0]  %s1, 256, %s32, [#allocation7], 128, 128, 8
    $region9: #{tpu_custom_call.1} parent=1 // pred_fallthru
      _
    // Predicated region
    $region10: #{tpu_custom_call.1} parent=1 // pred_check
      _
    $region11: #{tpu_custom_call.1} parent=1 // pred_check_branch
      %39 = sbr.rel (0) target = $region13
    $region12: #{tpu_custom_call.1} parent=1 // pred_region
      %s41 = ssub.s32 256, 256
      %42 = vsyncadd [#allocation7], %s41
      %s43 = sshll.u32 [#allocation8], 4
      %s44 = int_to_ptr.vmem [resolvable:$true] %s43
      %49 = dma.hbm_to_vmem [thread:$0]  %s2, 256, %s44, [#allocation7], 128, 128, 8
    $region13: #{tpu_custom_call.1} parent=1 // pred_fallthru
      _
    // Predicated region
    $region14: #{tpu_custom_call.1} parent=1 // pred_check
      _
    $region15: #{tpu_custom_call.1} parent=1 // pred_check_branch
      %51 = sbr.rel (0) target = $region17
    $region16: #{tpu_custom_call.1} parent=1 // pred_region
      %s53 = ssub.s32 256, 256
      %54 = vsyncadd [#allocation10], %s53
      %s55 = sshll.u32 [#allocation9], 4
      %s56 = int_to_ptr.vmem [resolvable:$true] %s55
      %61 = dma.hbm_to_vmem [thread:$0]  %s3, 256, %s56, [#allocation10], 128, 128, 8
    $region17: #{tpu_custom_call.1} parent=1 // pred_fallthru
      _
    // Predicated region
    $region18: #{tpu_custom_call.1} parent=1 // pred_check
      _
    $region19: #{tpu_custom_call.1} parent=1 // pred_check_branch
      %63 = sbr.rel (0) target = $region21
    $region20: #{tpu_custom_call.1} parent=1 // pred_region
      _
    $region21: #{tpu_custom_call.1} parent=1 // pred_fallthru
      _
    // Predicated region
    $region22: #{tpu_custom_call.1} parent=1 // pred_check
      _
    $region23: #{tpu_custom_call.1} parent=1 // pred_check_branch
      %65 = sbr.rel (0) target = $region25
    $region24: #{tpu_custom_call.1} parent=1 // pred_region
      _
    $region25: #{tpu_custom_call.1} parent=1 // pred_fallthru
      _
    // Predicated region
    $region26: #{tpu_custom_call.1} parent=1 // pred_check
      _
    $region27: #{tpu_custom_call.1} parent=1 // pred_check_branch
      %67 = sbr.rel (0) target = $region29
    $region28: #{tpu_custom_call.1} parent=1 // pred_region
      _
    $region29: #{tpu_custom_call.1} parent=1 // pred_fallthru
      _
    // Predicated region
    $region30: #{tpu_custom_call.1} parent=1 // pred_check
      _
    $region31: #{tpu_custom_call.1} parent=1 // pred_check_branch
      %69 = sbr.rel (0) target = $region33
    $region32: #{tpu_custom_call.1} parent=1 // pred_region
      %70 = dma.done [#allocation4], 128
    $region33: #{tpu_custom_call.1} parent=1 // pred_fallthru
      _
    // Predicated region
    $region34: #{tpu_custom_call.1} parent=1 // pred_check
      _
    $region35: #{tpu_custom_call.1} parent=1 // pred_check_branch
      %72 = sbr.rel (0) target = $region37
    $region36: #{tpu_custom_call.1} parent=1 // pred_region
      %73 = dma.done [#allocation7], 256
    $region37: #{tpu_custom_call.1} parent=1 // pred_fallthru
      _
    // Predicated region
    $region38: #{tpu_custom_call.1} parent=1 // pred_check
      _
    $region39: #{tpu_custom_call.1} parent=1 // pred_check_branch
      %75 = sbr.rel (0) target = $region41
    $region40: #{tpu_custom_call.1} parent=1 // pred_region
      %76 = dma.done [#allocation7], 256
    $region41: #{tpu_custom_call.1} parent=1 // pred_fallthru
      _
    // Predicated region
    $region42: #{tpu_custom_call.1} parent=1 // pred_check
      _
    $region43: #{tpu_custom_call.1} parent=1 // pred_check_branch
      %78 = sbr.rel (0) target = $region45
    $region44: #{tpu_custom_call.1} parent=1 // pred_region
      %79 = dma.done [#allocation10], 256
    $region45: #{tpu_custom_call.1} parent=1 // pred_fallthru
      _
    %p80 = scmp.eq.s32.totalorder 0, 0
    // Predicated region
    $region46: #{tpu_custom_call.1} parent=1 // pred_check
      %p81 = pneg %p80
    $region47: #{tpu_custom_call.1} parent=1 // pred_check_branch
      %83 = sbr.rel (%p81) target = $region49
    $region48: #{tpu_custom_call.1} parent=1 // pred_region
      %vm84 = vcmask 130048
      %85 = vst.msk [vmem:[#allocation2] sm:$0xff] %vm84, 0.0
    $region49: #{tpu_custom_call.1} parent=1 // pred_fallthru
      _
    %v86 = vld [vmem:[#allocation6] sm:$0xff]
    %v87 = vld [vmem:[#allocation6 + $0x8] sm:$0xff]
    %v88 = vld [vmem:[#allocation8] sm:$0xff]
    %v89 = vld [vmem:[#allocation8 + $0x8] sm:$0xff]
    %v90 = vld [vmem:[#allocation9] sm:$0xff]
    %v91 = vld [vmem:[#allocation9 + $0x8] sm:$0xff]
    %v92 = vmul.f32 %v88, %v90
    %v93 = vmul.f32 %v89, %v91
    %v94 = vadd.f32 %v86, %v92
    %v95 = vadd.f32 %v87, %v93
    %v96 = vld [vmem:[#allocation2] sm:$0xff]
    %v97 = vld [vmem:[#allocation3] sm:$0xff]
    %vm98 = vcmask 261120
    %v100 = vsel %vm98, %v97, 0
    %v103 = vsel %vm98, %v94, 0
    %v106 = vsel %vm98, %v95, 0
    %108 = vmatprep.subr.mxu0 0.0
    %109 = vmatpush1.xpose.msra.mxu0 0.0
    %110 = vmatprep.subr.mxu0 0.0
    %111 = vmatpush1.xpose.msra.mxu0 0.0
    %112 = vmatprep.subr.mxu0 0.0
    %113 = vmatpush1.xpose.msra.mxu0 0.0
    %114 = vmatprep.subr.mxu0 0.0
    %115 = vmatpush1.xpose.msra.mxu0 0.0
    %116 = vmatprep.subr.mxu0 0.0
    %117 = vmatpush1.xpose.msra.mxu0 0.0
    %118 = vmatprep.subr.mxu0 0.0
    %119 = vmatpush1.xpose.msra.mxu0 0.0
    %120 = vmatprep.subr.mxu0 0.0
    %121 = vmatpush1.xpose.msra.mxu0 0.0
    %122 = vmatprep.subr.mxu0 0.0
    %123 = vmatpush1.xpose.msra.mxu0 0.0
    %124 = vmatprep.subr.mxu0 0.0
    %125 = vmatpush1.xpose.msra.mxu0 0.0
    %126 = vmatprep.subr.mxu0 0.0
    %127 = vmatpush1.xpose.msra.mxu0 0.0
    %128 = vmatprep.subr.mxu0 0.0
    %129 = vmatpush1.xpose.msra.mxu0 0.0
    %130 = vmatprep.subr.mxu0 0.0
    %131 = vmatpush1.xpose.msra.mxu0 0.0
    %132 = vmatprep.subr.mxu0 0.0
    %133 = vmatpush1.xpose.msra.mxu0 0.0
    %134 = vmatprep.subr.mxu0 0.0
    %135 = vmatpush1.xpose.msra.mxu0 0.0
    %136 = vmatprep.subr.mxu0 0.0
    %137 = vmatpush1.xpose.msra.mxu0 %v106
    %138 = vmatprep.subr.mxu0 0.0
    %139 = vmatpush1.xpose.msra.mxu0 %v103
    %140 = vmatprep.subr.mxu0 0.0
    %141 = vmatpush2.xpose.msra.mxu0 0.0
    %142 = vmatprep.subr.mxu0 0.0
    %143 = vmatpush2.xpose.msra.mxu0 0.0
    %144 = vmatprep.subr.mxu0 0.0
    %145 = vmatpush2.xpose.msra.mxu0 0.0
    %146 = vmatprep.subr.mxu0 0.0
    %147 = vmatpush2.xpose.msra.mxu0 0.0
    %148 = vmatprep.subr.mxu0 0.0
    %149 = vmatpush2.xpose.msra.mxu0 0.0
    %150 = vmatprep.subr.mxu0 0.0
    %151 = vmatpush2.xpose.msra.mxu0 0.0
    %152 = vmatprep.subr.mxu0 0.0
    %153 = vmatpush2.xpose.msra.mxu0 0.0
    %154 = vmatprep.subr.mxu0 0.0
    %155 = vmatpush2.xpose.msra.mxu0 0.0
    %156 = vmatprep.subr.mxu0 0.0
    %157 = vmatpush2.xpose.msra.mxu0 0.0
    %158 = vmatprep.subr.mxu0 0.0
    %159 = vmatpush2.xpose.msra.mxu0 0.0
    %160 = vmatprep.subr.mxu0 0.0
    %161 = vmatpush2.xpose.msra.mxu0 0.0
    %162 = vmatprep.subr.mxu0 0.0
    %163 = vmatpush2.xpose.msra.mxu0 0.0
    %164 = vmatprep.subr.mxu0 0.0
    %165 = vmatpush2.xpose.msra.mxu0 0.0
    %166 = vmatprep.subr.mxu0 0.0
    %167 = vmatpush2.xpose.msra.mxu0 0.0
    %168 = vmatprep.subr.mxu0 0.0
    %169 = vmatpush2.xpose.msra.mxu0 0.0
    %170 = vmatprep.subr.mxu0 0.0
    %171 = vmatpush2.xpose.msra.mxu0 0.0
    %172 = vmatprep.mubr.f32.mxu0 0.0
    %173 = vmatmul.mubr.f32.gmra.mxu0 %v100
    %v174 = vpop.f32.mrf.mxu0
    %v175 = vadd.f32 0.0, %v174
    %v176 = vpop.f32.mrf.mxu0
    %177 = vdwg.mxu0
    %v178 = vadd.f32 %v96, %v175
    %vm179 = vcmask 130048
    %180 = vst.msk [vmem:[#allocation2] sm:$0xff] %vm179, %v178
    // Predicated region
    $region50: #{tpu_custom_call.1} parent=1 // pred_check
      %p181 = pneg %p80
    $region51: #{tpu_custom_call.1} parent=1 // pred_check_branch
      %183 = sbr.rel (%p181) target = $region53
    $region52: #{tpu_custom_call.1} parent=1 // pred_region
      %v184 = vld [vmem:[%s4] sm:$0x1]
      %v185 = vld [vmem:[%s5] sm:$0x1]
      %v186 = vld [vmem:[%s6] sm:$0x1]
      %v187 = vmul.f32 %v185, %v186
      %v188 = vadd.f32 %v184, %v187
      %v189 = vld [vmem:[#allocation2] sm:$0xff]
      %v191 = vlaneseq
      %v192 = vshrl.u32 %v191, 7
      %v193 = vsub.s32 0, %v192
      %v194 = vrot.slane %v188, %v193
      %v196 = vadd.f32 %v189, %v194
      %197 = vst.msk [vmem:[#allocation11] sm:$0xff] %vm179, %v196
    $region53: #{tpu_custom_call.1} parent=1 // pred_fallthru
      _
    // Predicated region
    $region54: #{tpu_custom_call.1} parent=1 // pred_check
      _
    $region55: #{tpu_custom_call.1} parent=1 // pred_check_branch
      %199 = sbr.rel (0) target = $region57
    $region56: #{tpu_custom_call.1} parent=1 // pred_region
      %s201 = ssub.s32 128, 128
      %202 = vsyncadd [#allocation5], %s201
      %s204 = sshll.u32 [#allocation11], 4
      %s205 = int_to_ptr.vmem [resolvable:$true] %s204
      %207 = dma.vmem_to_hbm [thread:$0]  %s205, 128, %s7, [#allocation5]
    $region57: #{tpu_custom_call.1} parent=1 // pred_fallthru
      _
    // Predicated region
    $region58: #{tpu_custom_call.1} parent=1 // pred_check
      _
    $region59: #{tpu_custom_call.1} parent=1 // pred_check_branch
      %209 = sbr.rel (0) target = $region61
    $region60: #{tpu_custom_call.1} parent=1 // pred_region
      %210 = dma.done [#allocation5], 128
    $region61: #{tpu_custom_call.1} parent=1 // pred_fallthru
      _
    %211 = vsyncpa [#allocation4], 1
    %212 = vsyncpa [#allocation7], 1
    %213 = vsyncpa [#allocation10], 1
    %214 = vsyncpa [#allocation5], 1

</llo_original>
